<compile_context>
chip_gen: v7x
topology: tpu7x:2x2x1
jax: 0.10.0
libtpu: 0.0.40
codegen_flags: <defaults>
</compile_context>

<pallas_src>
import jax
import jax.numpy as jnp
from jax import lax
from jax.experimental import pallas as pl
from jax.experimental.pallas import tpu as pltpu  # noqa: F401  (TPU backend assumed)


def _make_fused_kernel(N, s, Cout, Ck, P, inv_count, eps):
    def kernel(p_ref, w_ref, g_ref, b_ref, o_ref):
        # p_ref: (s, s, N, Ck, P)    per-output-phase im2col patches
        # w_ref: (s, s, Cout, Ck)    per-phase packed (flipped) weights
        # g_ref: (Cout, 1)           BN gamma
        # b_ref: (Cout, 1)           BN beta
        # o_ref: (N, s, s, Cout, P)  BN+ReLU output, phase-major layout
        accs = []
        sum_c = jnp.zeros((Cout, 1), jnp.float32)
        sumsq = jnp.zeros((Cout, 1), jnp.float32)
        # Conv pass: s*s*N small MXU matmuls, spatial (P=Qh*Qw) on lanes.
        for n in range(N):
            for ph in range(s):
                for pw in range(s):
                    acc = jnp.dot(w_ref[ph, pw, :, :], p_ref[ph, pw, n, :, :],
                                  preferred_element_type=jnp.float32)   # (Cout, P)
                    accs.append(acc)
                    # single-pass batch stats (sum and sum of squares per channel)
                    sum_c = sum_c + jnp.sum(acc, axis=1, keepdims=True)
                    sumsq = sumsq + jnp.sum(acc * acc, axis=1, keepdims=True)
        # Training-mode BatchNorm: biased variance over (N, H, W), eps inside rsqrt.
        mean = sum_c * inv_count
        var = sumsq * inv_count - mean * mean
        scale = g_ref[...] * lax.rsqrt(var + eps)        # (Cout, 1)
        shift = b_ref[...] - mean * scale                # (Cout, 1)
        # Epilogue: normalize + ReLU, lane-dense (Cout, P) stores.
        idx = 0
        for n in range(N):
            for ph in range(s):
                for pw in range(s):
                    o_ref[n, ph, pw, :, :] = jnp.maximum(accs[idx] * scale + shift, 0.0)
                    idx += 1
    return kernel


def conv2d_transpose_bn_relu(x_nchw, w, b, gamma, beta, *,
                             stride, padding, output_padding=0, eps=1e-5):
    """x_nchw: (N, Cin, H, W); w: (Cin, Cout, K, K) (PyTorch ConvTranspose2d layout);
    b/gamma/beta: (Cout,).  Returns (N, Cout, H_out, W_out) == module forward output.

    NOTE: the conv bias `b` is accepted for interface parity but not applied — the
    following batch-statistics BatchNorm subtracts the batch mean, which cancels a
    constant per-channel bias exactly (verified against the reference below).
    """
    del b
    N, Cin, H, W = x_nchw.shape
    Cin_w, Cout, K, K2 = w.shape
    assert Cin == Cin_w and K == K2
    s, p, op = stride, padding, output_padding
    H_out = (H - 1) * s - 2 * p + K + op
    W_out = (W - 1) * s - 2 * p + K + op
    # TODO(synk): configs with K % s != 0 or H_out/W_out not divisible by s need
    # ragged per-phase shapes; fall back to a dilated-input formulation for those.
    assert K % s == 0 and H_out % s == 0 and W_out % s == 0

    Qh, Qw = H_out // s, W_out // s
    P = Qh * Qw
    T = K // s                              # contributing taps per phase per axis
    Ck = T * T * Cin                        # per-phase matmul contraction size
    lo = K - 1 - p

    # Contributing flipped-kernel rows and input-row offsets for each output phase.
    kh_sets = [[kh for kh in range(K) if (ph + kh - lo) % s == 0] for ph in range(s)]
    dh_sets = [[(ph + kh - lo) // s for kh in ks] for ph, ks in enumerate(kh_sets)]
    kw_sets, dw_sets = kh_sets, dh_sets     # square kernel, same stride/pad both axes

    all_d = [d for row in dh_sets for d in row]
    PB = max(0, -min(all_d))                                # small halo pads only
    PA_h = max(0, max(all_d) + Qh - 1 - (H - 1))
    PA_w = max(0, max(all_d) + Qw - 1 - (W - 1))

    # NOTE: kept f32 end-to-end to match the f32 PyTorch module; at larger shapes
    # cast patches/weights to bf16 for the MXU and keep the f32 accumulation.
    xf = x_nchw.astype(jnp.float32)
    x_pad = jnp.pad(xf, ((0, 0), (0, 0), (PB, PA_h), (PB, PA_w)))

    # ---- wrapper-side per-phase im2col: contiguous lane-aligned matmul operands ----
    phase_patches = []
    phase_weights = []
    for ph in range(s):
        for pw in range(s):
            taps, mats = [], []
            for a in range(T):
                dh = dh_sets[ph][a] + PB
                kh = kh_sets[ph][a]
                for bb in range(T):
                    dw = dw_sets[pw][bb] + PB
                    kw = kw_sets[pw][bb]
                    taps.append(x_pad[:, :, dh:dh + Qh, dw:dw + Qw])   # (N,Cin,Qh,Qw)
                    mats.append(w[:, :, K - 1 - kh, K - 1 - kw].T)     # (Cout,Cin)
            phase_patches.append(jnp.stack(taps, axis=1).reshape(N, Ck, P))
            phase_weights.append(jnp.stack(mats, axis=1).reshape(Cout, Ck))
    patches = jnp.stack(phase_patches, 0).reshape(s, s, N, Ck, P).astype(jnp.float32)
    w_packed = jnp.stack(phase_weights, 0).reshape(s, s, Cout, Ck).astype(jnp.float32)

    # ---- single fused Pallas kernel: conv matmuls + batch-stat BN + ReLU ----
    out_phase = pl.pallas_call(
        _make_fused_kernel(N, s, Cout, Ck, P, 1.0 / float(N * H_out * W_out), eps),
        out_shape=jax.ShapeDtypeStruct((N, s, s, Cout, P), jnp.float32),
    )(patches, w_packed,
      gamma.reshape(Cout, 1).astype(jnp.float32),
      beta.reshape(Cout, 1).astype(jnp.float32))

    # Phase re-interleave: [n, ph, pw, c, qh*Qw+qw] -> [n, c, qh*s+ph, qw*s+pw].
    out = out_phase.reshape(N, s, s, Cout, Qh, Qw)
    out = jnp.transpose(out, (0, 3, 4, 1, 5, 2))
    return out.reshape(N, Cout, H_out, W_out)


def _reference(x, w, b, gamma, beta, stride, padding, output_padding):
    # Pure-JAX reference of the module forward (includes the conv bias).
    s, p, op = stride, padding, output_padding
    K = w.shape[2]
    w_oihw = jnp.transpose(w[:, :, ::-1, ::-1], (1, 0, 2, 3))            # (Cout,Cin,K,K)
    conv = lax.conv_general_dilated(
        x, w_oihw, window_strides=(1, 1),
        padding=[(K - 1 - p, K - 1 - p + op)] * 2,
        lhs_dilation=(s, s),
        dimension_numbers=("NCHW", "OIHW", "NCHW"))
    conv = conv + b.reshape(1, -1, 1, 1)
    mean = jnp.mean(conv, axis=(0, 2, 3), keepdims=True)
    var = jnp.mean((conv - mean) ** 2, axis=(0, 2, 3), keepdims=True)
    y = (conv - mean) * lax.rsqrt(var + 1e-5) * gamma.reshape(1, -1, 1, 1) \
        + beta.reshape(1, -1, 1, 1)
    return jnp.maximum(y, 0.0)


if __name__ == "__main__":
    # Module config: Conv2dTranspose(cin=4, cout=8, kernel_size=4, stride=2, padding=1)
    N, Cin, H, W = 2, 4, 16, 16
    Cout, K, stride, padding, output_padding = 8, 4, 2, 1, 0

    key = jax.random.PRNGKey(0)
    k1, k2, k3 = jax.random.split(key, 3)
    x = jax.random.normal(k1, (N, Cin, H, W), jnp.float32)
    w = jax.random.normal(k2, (Cin, Cout, K, K), jnp.float32) * 0.1      # ConvTranspose2d.weight
    b = jax.random.normal(k3, (Cout,), jnp.float32) * 0.1                # ConvTranspose2d.bias
    gamma = jnp.ones((Cout,), jnp.float32)                               # BatchNorm2d.weight init
    beta = jnp.zeros((Cout,), jnp.float32)                               # BatchNorm2d.bias init
    # TODO(synk): BatchNorm running_mean/running_var state updates are a training
    # side effect and do not affect this forward output; not reproduced.

    out = conv2d_transpose_bn_relu(
        x, w, b, gamma, beta,
        stride=stride, padding=padding, output_padding=output_padding)
    out = jax.block_until_ready(out)

    H_out = (H - 1) * stride - 2 * padding + K + output_padding
    W_out = (W - 1) * stride - 2 * padding + K + output_padding
    assert out.shape == (N, Cout, H_out, W_out), out.shape

    ref = _reference(x, w, b, gamma, beta, stride, padding, output_padding)
    assert jnp.allclose(out, ref, atol=2e-4, rtol=2e-4), float(jnp.max(jnp.abs(out - ref)))

    print("KERNEL_OK")
</pallas_src>

<mosaic_0001>
module attributes {stable_mosaic.version = 11 : i64} {
  func.func @kernel(%arg0: memref<2x2x2x16x256xf32, #tpu.memory_space<vmem>>, %arg1: memref<2x2x8x16xf32, #tpu.memory_space<vmem>>, %arg2: memref<8x1xf32, #tpu.memory_space<vmem>>, %arg3: memref<8x1xf32, #tpu.memory_space<vmem>>, %arg4: memref<2x2x2x8x256xf32, #tpu.memory_space<vmem>>) attributes {dimension_semantics = [], scalar_prefetch = 0 : i64, scratch_operands = 0 : i64, tpu.core_type = #tpu.core_type<tc>} {
    %cst = arith.constant 0.000000e+00 : f32
    %0 = vector.broadcast %cst : f32 to vector<8x1xf32>
    %cst_0 = arith.constant 0.000000e+00 : f32
    %1 = vector.broadcast %cst_0 : f32 to vector<8x1xf32>
    %c0 = arith.constant 0 : index
    %c0_1 = arith.constant 0 : index
    %c0_2 = arith.constant 0 : index
    %c0_3 = arith.constant 0 : index
    %2 = vector.load %arg1[%c0, %c0_1, %c0_2, %c0_3] : memref<2x2x8x16xf32, #tpu.memory_space<vmem>>, vector<1x1x8x16xf32>
    %3 = vector.shape_cast %2 : vector<1x1x8x16xf32> to vector<8x16xf32>
    %c0_4 = arith.constant 0 : index
    %c0_5 = arith.constant 0 : index
    %c0_6 = arith.constant 0 : index
    %c0_7 = arith.constant 0 : index
    %c0_8 = arith.constant 0 : index
    %4 = vector.load %arg0[%c0_4, %c0_5, %c0_6, %c0_7, %c0_8] : memref<2x2x2x16x256xf32, #tpu.memory_space<vmem>>, vector<1x1x1x16x256xf32>
    %5 = vector.shape_cast %4 : vector<1x1x1x16x256xf32> to vector<16x256xf32>
    %cst_9 = arith.constant dense<0.000000e+00> : vector<8x256xf32>
    %6 = tpu.matmul %3, %5, %cst_9 {dimension_numbers = #tpu.dot_dimension_numbers<[1], [0], [0], [1], [0, 0, 1, 1], [], []>} : vector<8x16xf32>, vector<16x256xf32>, vector<8x256xf32> -> vector<8x256xf32>
    %cst_10 = arith.constant dense<0.000000e+00> : vector<8xf32>
    %7 = vector.multi_reduction <add>, %6, %cst_10 [1] : vector<8x256xf32> to vector<8xf32>
    %8 = vector.shape_cast %7 : vector<8xf32> to vector<8x1xf32>
    %9 = arith.addf %0, %8 : vector<8x1xf32>
    %10 = arith.mulf %6, %6 : vector<8x256xf32>
    %cst_11 = arith.constant dense<0.000000e+00> : vector<8xf32>
    %11 = vector.multi_reduction <add>, %10, %cst_11 [1] : vector<8x256xf32> to vector<8xf32>
    %12 = vector.shape_cast %11 : vector<8xf32> to vector<8x1xf32>
    %13 = arith.addf %1, %12 : vector<8x1xf32>
    %c0_12 = arith.constant 0 : index
    %c1 = arith.constant 1 : index
    %c0_13 = arith.constant 0 : index
    %c0_14 = arith.constant 0 : index
    %14 = vector.load %arg1[%c0_12, %c1, %c0_13, %c0_14] : memref<2x2x8x16xf32, #tpu.memory_space<vmem>>, vector<1x1x8x16xf32>
    %15 = vector.shape_cast %14 : vector<1x1x8x16xf32> to vector<8x16xf32>
    %c0_15 = arith.constant 0 : index
    %c1_16 = arith.constant 1 : index
    %c0_17 = arith.constant 0 : index
    %c0_18 = arith.constant 0 : index
    %c0_19 = arith.constant 0 : index
    %16 = vector.load %arg0[%c0_15, %c1_16, %c0_17, %c0_18, %c0_19] : memref<2x2x2x16x256xf32, #tpu.memory_space<vmem>>, vector<1x1x1x16x256xf32>
    %17 = vector.shape_cast %16 : vector<1x1x1x16x256xf32> to vector<16x256xf32>
    %cst_20 = arith.constant dense<0.000000e+00> : vector<8x256xf32>
    %18 = tpu.matmul %15, %17, %cst_20 {dimension_numbers = #tpu.dot_dimension_numbers<[1], [0], [0], [1], [0, 0, 1, 1], [], []>} : vector<8x16xf32>, vector<16x256xf32>, vector<8x256xf32> -> vector<8x256xf32>
    %cst_21 = arith.constant dense<0.000000e+00> : vector<8xf32>
    %19 = vector.multi_reduction <add>, %18, %cst_21 [1] : vector<8x256xf32> to vector<8xf32>
    %20 = vector.shape_cast %19 : vector<8xf32> to vector<8x1xf32>
    %21 = arith.addf %9, %20 : vector<8x1xf32>
    %22 = arith.mulf %18, %18 : vector<8x256xf32>
    %cst_22 = arith.constant dense<0.000000e+00> : vector<8xf32>
    %23 = vector.multi_reduction <add>, %22, %cst_22 [1] : vector<8x256xf32> to vector<8xf32>
    %24 = vector.shape_cast %23 : vector<8xf32> to vector<8x1xf32>
    %25 = arith.addf %13, %24 : vector<8x1xf32>
    %c1_23 = arith.constant 1 : index
    %c0_24 = arith.constant 0 : index
    %c0_25 = arith.constant 0 : index
    %c0_26 = arith.constant 0 : index
    %26 = vector.load %arg1[%c1_23, %c0_24, %c0_25, %c0_26] : memref<2x2x8x16xf32, #tpu.memory_space<vmem>>, vector<1x1x8x16xf32>
    %27 = vector.shape_cast %26 : vector<1x1x8x16xf32> to vector<8x16xf32>
    %c1_27 = arith.constant 1 : index
    %c0_28 = arith.constant 0 : index
    %c0_29 = arith.constant 0 : index
    %c0_30 = arith.constant 0 : index
    %c0_31 = arith.constant 0 : index
    %28 = vector.load %arg0[%c1_27, %c0_28, %c0_29, %c0_30, %c0_31] : memref<2x2x2x16x256xf32, #tpu.memory_space<vmem>>, vector<1x1x1x16x256xf32>
    %29 = vector.shape_cast %28 : vector<1x1x1x16x256xf32> to vector<16x256xf32>
    %cst_32 = arith.constant dense<0.000000e+00> : vector<8x256xf32>
    %30 = tpu.matmul %27, %29, %cst_32 {dimension_numbers = #tpu.dot_dimension_numbers<[1], [0], [0], [1], [0, 0, 1, 1], [], []>} : vector<8x16xf32>, vector<16x256xf32>, vector<8x256xf32> -> vector<8x256xf32>
    %cst_33 = arith.constant dense<0.000000e+00> : vector<8xf32>
    %31 = vector.multi_reduction <add>, %30, %cst_33 [1] : vector<8x256xf32> to vector<8xf32>
    %32 = vector.shape_cast %31 : vector<8xf32> to vector<8x1xf32>
    %33 = arith.addf %21, %32 : vector<8x1xf32>
    %34 = arith.mulf %30, %30 : vector<8x256xf32>
    %cst_34 = arith.constant dense<0.000000e+00> : vector<8xf32>
    %35 = vector.multi_reduction <add>, %34, %cst_34 [1] : vector<8x256xf32> to vector<8xf32>
    %36 = vector.shape_cast %35 : vector<8xf32> to vector<8x1xf32>
    %37 = arith.addf %25, %36 : vector<8x1xf32>
    %c1_35 = arith.constant 1 : index
    %c1_36 = arith.constant 1 : index
    %c0_37 = arith.constant 0 : index
    %c0_38 = arith.constant 0 : index
    %38 = vector.load %arg1[%c1_35, %c1_36, %c0_37, %c0_38] : memref<2x2x8x16xf32, #tpu.memory_space<vmem>>, vector<1x1x8x16xf32>
    %39 = vector.shape_cast %38 : vector<1x1x8x16xf32> to vector<8x16xf32>
    %c1_39 = arith.constant 1 : index
    %c1_40 = arith.constant 1 : index
    %c0_41 = arith.constant 0 : index
    %c0_42 = arith.constant 0 : index
    %c0_43 = arith.constant 0 : index
    %40 = vector.load %arg0[%c1_39, %c1_40, %c0_41, %c0_42, %c0_43] : memref<2x2x2x16x256xf32, #tpu.memory_space<vmem>>, vector<1x1x1x16x256xf32>
    %41 = vector.shape_cast %40 : vector<1x1x1x16x256xf32> to vector<16x256xf32>
    %cst_44 = arith.constant dense<0.000000e+00> : vector<8x256xf32>
    %42 = tpu.matmul %39, %41, %cst_44 {dimension_numbers = #tpu.dot_dimension_numbers<[1], [0], [0], [1], [0, 0, 1, 1], [], []>} : vector<8x16xf32>, vector<16x256xf32>, vector<8x256xf32> -> vector<8x256xf32>
    %cst_45 = arith.constant dense<0.000000e+00> : vector<8xf32>
    %43 = vector.multi_reduction <add>, %42, %cst_45 [1] : vector<8x256xf32> to vector<8xf32>
    %44 = vector.shape_cast %43 : vector<8xf32> to vector<8x1xf32>
    %45 = arith.addf %33, %44 : vector<8x1xf32>
    %46 = arith.mulf %42, %42 : vector<8x256xf32>
    %cst_46 = arith.constant dense<0.000000e+00> : vector<8xf32>
    %47 = vector.multi_reduction <add>, %46, %cst_46 [1] : vector<8x256xf32> to vector<8xf32>
    %48 = vector.shape_cast %47 : vector<8xf32> to vector<8x1xf32>
    %49 = arith.addf %37, %48 : vector<8x1xf32>
    %c0_47 = arith.constant 0 : index
    %c0_48 = arith.constant 0 : index
    %c0_49 = arith.constant 0 : index
    %c0_50 = arith.constant 0 : index
    %50 = vector.load %arg1[%c0_47, %c0_48, %c0_49, %c0_50] : memref<2x2x8x16xf32, #tpu.memory_space<vmem>>, vector<1x1x8x16xf32>
    %51 = vector.shape_cast %50 : vector<1x1x8x16xf32> to vector<8x16xf32>
    %c0_51 = arith.constant 0 : index
    %c0_52 = arith.constant 0 : index
    %c1_53 = arith.constant 1 : index
    %c0_54 = arith.constant 0 : index
    %c0_55 = arith.constant 0 : index
    %52 = vector.load %arg0[%c0_51, %c0_52, %c1_53, %c0_54, %c0_55] : memref<2x2x2x16x256xf32, #tpu.memory_space<vmem>>, vector<1x1x1x16x256xf32>
    %53 = vector.shape_cast %52 : vector<1x1x1x16x256xf32> to vector<16x256xf32>
    %cst_56 = arith.constant dense<0.000000e+00> : vector<8x256xf32>
    %54 = tpu.matmul %51, %53, %cst_56 {dimension_numbers = #tpu.dot_dimension_numbers<[1], [0], [0], [1], [0, 0, 1, 1], [], []>} : vector<8x16xf32>, vector<16x256xf32>, vector<8x256xf32> -> vector<8x256xf32>
    %cst_57 = arith.constant dense<0.000000e+00> : vector<8xf32>
    %55 = vector.multi_reduction <add>, %54, %cst_57 [1] : vector<8x256xf32> to vector<8xf32>
    %56 = vector.shape_cast %55 : vector<8xf32> to vector<8x1xf32>
    %57 = arith.addf %45, %56 : vector<8x1xf32>
    %58 = arith.mulf %54, %54 : vector<8x256xf32>
    %cst_58 = arith.constant dense<0.000000e+00> : vector<8xf32>
    %59 = vector.multi_reduction <add>, %58, %cst_58 [1] : vector<8x256xf32> to vector<8xf32>
    %60 = vector.shape_cast %59 : vector<8xf32> to vector<8x1xf32>
    %61 = arith.addf %49, %60 : vector<8x1xf32>
    %c0_59 = arith.constant 0 : index
    %c1_60 = arith.constant 1 : index
    %c0_61 = arith.constant 0 : index
    %c0_62 = arith.constant 0 : index
    %62 = vector.load %arg1[%c0_59, %c1_60, %c0_61, %c0_62] : memref<2x2x8x16xf32, #tpu.memory_space<vmem>>, vector<1x1x8x16xf32>
    %63 = vector.shape_cast %62 : vector<1x1x8x16xf32> to vector<8x16xf32>
    %c0_63 = arith.constant 0 : index
    %c1_64 = arith.constant 1 : index
    %c1_65 = arith.constant 1 : index
    %c0_66 = arith.constant 0 : index
    %c0_67 = arith.constant 0 : index
    %64 = vector.load %arg0[%c0_63, %c1_64, %c1_65, %c0_66, %c0_67] : memref<2x2x2x16x256xf32, #tpu.memory_space<vmem>>, vector<1x1x1x16x256xf32>
    %65 = vector.shape_cast %64 : vector<1x1x1x16x256xf32> to vector<16x256xf32>
    %cst_68 = arith.constant dense<0.000000e+00> : vector<8x256xf32>
    %66 = tpu.matmul %63, %65, %cst_68 {dimension_numbers = #tpu.dot_dimension_numbers<[1], [0], [0], [1], [0, 0, 1, 1], [], []>} : vector<8x16xf32>, vector<16x256xf32>, vector<8x256xf32> -> vector<8x256xf32>
    %cst_69 = arith.constant dense<0.000000e+00> : vector<8xf32>
    %67 = vector.multi_reduction <add>, %66, %cst_69 [1] : vector<8x256xf32> to vector<8xf32>
    %68 = vector.shape_cast %67 : vector<8xf32> to vector<8x1xf32>
    %69 = arith.addf %57, %68 : vector<8x1xf32>
    %70 = arith.mulf %66, %66 : vector<8x256xf32>
    %cst_70 = arith.constant dense<0.000000e+00> : vector<8xf32>
    %71 = vector.multi_reduction <add>, %70, %cst_70 [1] : vector<8x256xf32> to vector<8xf32>
    %72 = vector.shape_cast %71 : vector<8xf32> to vector<8x1xf32>
    %73 = arith.addf %61, %72 : vector<8x1xf32>
    %c1_71 = arith.constant 1 : index
    %c0_72 = arith.constant 0 : index
    %c0_73 = arith.constant 0 : index
    %c0_74 = arith.constant 0 : index
    %74 = vector.load %arg1[%c1_71, %c0_72, %c0_73, %c0_74] : memref<2x2x8x16xf32, #tpu.memory_space<vmem>>, vector<1x1x8x16xf32>
    %75 = vector.shape_cast %74 : vector<1x1x8x16xf32> to vector<8x16xf32>
    %c1_75 = arith.constant 1 : index
    %c0_76 = arith.constant 0 : index
    %c1_77 = arith.constant 1 : index
    %c0_78 = arith.constant 0 : index
    %c0_79 = arith.constant 0 : index
    %76 = vector.load %arg0[%c1_75, %c0_76, %c1_77, %c0_78, %c0_79] : memref<2x2x2x16x256xf32, #tpu.memory_space<vmem>>, vector<1x1x1x16x256xf32>
    %77 = vector.shape_cast %76 : vector<1x1x1x16x256xf32> to vector<16x256xf32>
    %cst_80 = arith.constant dense<0.000000e+00> : vector<8x256xf32>
    %78 = tpu.matmul %75, %77, %cst_80 {dimension_numbers = #tpu.dot_dimension_numbers<[1], [0], [0], [1], [0, 0, 1, 1], [], []>} : vector<8x16xf32>, vector<16x256xf32>, vector<8x256xf32> -> vector<8x256xf32>
    %cst_81 = arith.constant dense<0.000000e+00> : vector<8xf32>
    %79 = vector.multi_reduction <add>, %78, %cst_81 [1] : vector<8x256xf32> to vector<8xf32>
    %80 = vector.shape_cast %79 : vector<8xf32> to vector<8x1xf32>
    %81 = arith.addf %69, %80 : vector<8x1xf32>
    %82 = arith.mulf %78, %78 : vector<8x256xf32>
    %cst_82 = arith.constant dense<0.000000e+00> : vector<8xf32>
    %83 = vector.multi_reduction <add>, %82, %cst_82 [1] : vector<8x256xf32> to vector<8xf32>
    %84 = vector.shape_cast %83 : vector<8xf32> to vector<8x1xf32>
    %85 = arith.addf %73, %84 : vector<8x1xf32>
    %c1_83 = arith.constant 1 : index
    %c1_84 = arith.constant 1 : index
    %c0_85 = arith.constant 0 : index
    %c0_86 = arith.constant 0 : index
    %86 = vector.load %arg1[%c1_83, %c1_84, %c0_85, %c0_86] : memref<2x2x8x16xf32, #tpu.memory_space<vmem>>, vector<1x1x8x16xf32>
    %87 = vector.shape_cast %86 : vector<1x1x8x16xf32> to vector<8x16xf32>
    %c1_87 = arith.constant 1 : index
    %c1_88 = arith.constant 1 : index
    %c1_89 = arith.constant 1 : index
    %c0_90 = arith.constant 0 : index
    %c0_91 = arith.constant 0 : index
    %88 = vector.load %arg0[%c1_87, %c1_88, %c1_89, %c0_90, %c0_91] : memref<2x2x2x16x256xf32, #tpu.memory_space<vmem>>, vector<1x1x1x16x256xf32>
    %89 = vector.shape_cast %88 : vector<1x1x1x16x256xf32> to vector<16x256xf32>
    %cst_92 = arith.constant dense<0.000000e+00> : vector<8x256xf32>
    %90 = tpu.matmul %87, %89, %cst_92 {dimension_numbers = #tpu.dot_dimension_numbers<[1], [0], [0], [1], [0, 0, 1, 1], [], []>} : vector<8x16xf32>, vector<16x256xf32>, vector<8x256xf32> -> vector<8x256xf32>
    %cst_93 = arith.constant dense<0.000000e+00> : vector<8xf32>
    %91 = vector.multi_reduction <add>, %90, %cst_93 [1] : vector<8x256xf32> to vector<8xf32>
    %92 = vector.shape_cast %91 : vector<8xf32> to vector<8x1xf32>
    %93 = arith.addf %81, %92 : vector<8x1xf32>
    %94 = arith.mulf %90, %90 : vector<8x256xf32>
    %cst_94 = arith.constant dense<0.000000e+00> : vector<8xf32>
    %95 = vector.multi_reduction <add>, %94, %cst_94 [1] : vector<8x256xf32> to vector<8xf32>
    %96 = vector.shape_cast %95 : vector<8xf32> to vector<8x1xf32>
    %97 = arith.addf %85, %96 : vector<8x1xf32>
    %cst_95 = arith.constant 4.8828125E-4 : f32
    %98 = vector.broadcast %cst_95 : f32 to vector<8x1xf32>
    %99 = arith.mulf %93, %98 : vector<8x1xf32>
    %cst_96 = arith.constant 4.8828125E-4 : f32
    %100 = vector.broadcast %cst_96 : f32 to vector<8x1xf32>
    %101 = arith.mulf %97, %100 : vector<8x1xf32>
    %102 = arith.mulf %99, %99 : vector<8x1xf32>
    %103 = arith.subf %101, %102 : vector<8x1xf32>
    %c0_97 = arith.constant 0 : index
    %c0_98 = arith.constant 0 : index
    %104 = vector.load %arg2[%c0_97, %c0_98] : memref<8x1xf32, #tpu.memory_space<vmem>>, vector<8x1xf32>
    %cst_99 = arith.constant 9.99999974E-6 : f32
    %105 = vector.broadcast %cst_99 : f32 to vector<8x1xf32>
    %106 = arith.addf %103, %105 : vector<8x1xf32>
    %107 = math.rsqrt %106 : vector<8x1xf32>
    %108 = arith.mulf %104, %107 : vector<8x1xf32>
    %c0_100 = arith.constant 0 : index
    %c0_101 = arith.constant 0 : index
    %109 = vector.load %arg3[%c0_100, %c0_101] : memref<8x1xf32, #tpu.memory_space<vmem>>, vector<8x1xf32>
    %110 = arith.mulf %99, %108 : vector<8x1xf32>
    %111 = arith.subf %109, %110 : vector<8x1xf32>
    %112 = vector.broadcast %108 : vector<8x1xf32> to vector<8x256xf32>
    %113 = arith.mulf %6, %112 : vector<8x256xf32>
    %114 = vector.broadcast %111 : vector<8x1xf32> to vector<8x256xf32>
    %115 = arith.addf %113, %114 : vector<8x256xf32>
    %cst_102 = arith.constant 0.000000e+00 : f32
    %116 = vector.broadcast %cst_102 : f32 to vector<8x256xf32>
    %117 = arith.maximumf %115, %116 : vector<8x256xf32>
    %c0_103 = arith.constant 0 : index
    %c0_104 = arith.constant 0 : index
    %c0_105 = arith.constant 0 : index
    %c0_106 = arith.constant 0 : index
    %c0_107 = arith.constant 0 : index
    %118 = vector.load %arg4[%c0_103, %c0_104, %c0_105, %c0_106, %c0_107] : memref<2x2x2x8x256xf32, #tpu.memory_space<vmem>>, vector<1x1x1x8x256xf32>
    %119 = vector.shape_cast %118 : vector<1x1x1x8x256xf32> to vector<8x256xf32>
    %120 = vector.shape_cast %117 : vector<8x256xf32> to vector<1x1x1x8x256xf32>
    tpu.vector_store %arg4[%c0_103, %c0_104, %c0_105, %c0_106, %c0_107], %120 {strides = array<i32>} : memref<2x2x2x8x256xf32, #tpu.memory_space<vmem>>, vector<1x1x1x8x256xf32>,
    %121 = vector.broadcast %108 : vector<8x1xf32> to vector<8x256xf32>
    %122 = arith.mulf %18, %121 : vector<8x256xf32>
    %123 = vector.broadcast %111 : vector<8x1xf32> to vector<8x256xf32>
    %124 = arith.addf %122, %123 : vector<8x256xf32>
    %cst_108 = arith.constant 0.000000e+00 : f32
    %125 = vector.broadcast %cst_108 : f32 to vector<8x256xf32>
    %126 = arith.maximumf %124, %125 : vector<8x256xf32>
    %c0_109 = arith.constant 0 : index
    %c0_110 = arith.constant 0 : index
    %c1_111 = arith.constant 1 : index
    %c0_112 = arith.constant 0 : index
    %c0_113 = arith.constant 0 : index
    %127 = vector.load %arg4[%c0_109, %c0_110, %c1_111, %c0_112, %c0_113] : memref<2x2x2x8x256xf32, #tpu.memory_space<vmem>>, vector<1x1x1x8x256xf32>
    %128 = vector.shape_cast %127 : vector<1x1x1x8x256xf32> to vector<8x256xf32>
    %129 = vector.shape_cast %126 : vector<8x256xf32> to vector<1x1x1x8x256xf32>
    tpu.vector_store %arg4[%c0_109, %c0_110, %c1_111, %c0_112, %c0_113], %129 {strides = array<i32>} : memref<2x2x2x8x256xf32, #tpu.memory_space<vmem>>, vector<1x1x1x8x256xf32>,
    %130 = vector.broadcast %108 : vector<8x1xf32> to vector<8x256xf32>
    %131 = arith.mulf %30, %130 : vector<8x256xf32>
    %132 = vector.broadcast %111 : vector<8x1xf32> to vector<8x256xf32>
    %133 = arith.addf %131, %132 : vector<8x256xf32>
    %cst_114 = arith.constant 0.000000e+00 : f32
    %134 = vector.broadcast %cst_114 : f32 to vector<8x256xf32>
    %135 = arith.maximumf %133, %134 : vector<8x256xf32>
    %c0_115 = arith.constant 0 : index
    %c1_116 = arith.constant 1 : index
    %c0_117 = arith.constant 0 : index
    %c0_118 = arith.constant 0 : index
    %c0_119 = arith.constant 0 : index
    %136 = vector.load %arg4[%c0_115, %c1_116, %c0_117, %c0_118, %c0_119] : memref<2x2x2x8x256xf32, #tpu.memory_space<vmem>>, vector<1x1x1x8x256xf32>
    %137 = vector.shape_cast %136 : vector<1x1x1x8x256xf32> to vector<8x256xf32>
    %138 = vector.shape_cast %135 : vector<8x256xf32> to vector<1x1x1x8x256xf32>
    tpu.vector_store %arg4[%c0_115, %c1_116, %c0_117, %c0_118, %c0_119], %138 {strides = array<i32>} : memref<2x2x2x8x256xf32, #tpu.memory_space<vmem>>, vector<1x1x1x8x256xf32>,
    %139 = vector.broadcast %108 : vector<8x1xf32> to vector<8x256xf32>
    %140 = arith.mulf %42, %139 : vector<8x256xf32>
    %141 = vector.broadcast %111 : vector<8x1xf32> to vector<8x256xf32>
    %142 = arith.addf %140, %141 : vector<8x256xf32>
    %cst_120 = arith.constant 0.000000e+00 : f32
    %143 = vector.broadcast %cst_120 : f32 to vector<8x256xf32>
    %144 = arith.maximumf %142, %143 : vector<8x256xf32>
    %c0_121 = arith.constant 0 : index
    %c1_122 = arith.constant 1 : index
    %c1_123 = arith.constant 1 : index
    %c0_124 = arith.constant 0 : index
    %c0_125 = arith.constant 0 : index
    %145 = vector.load %arg4[%c0_121, %c1_122, %c1_123, %c0_124, %c0_125] : memref<2x2x2x8x256xf32, #tpu.memory_space<vmem>>, vector<1x1x1x8x256xf32>
    %146 = vector.shape_cast %145 : vector<1x1x1x8x256xf32> to vector<8x256xf32>
    %147 = vector.shape_cast %144 : vector<8x256xf32> to vector<1x1x1x8x256xf32>
    tpu.vector_store %arg4[%c0_121, %c1_122, %c1_123, %c0_124, %c0_125], %147 {strides = array<i32>} : memref<2x2x2x8x256xf32, #tpu.memory_space<vmem>>, vector<1x1x1x8x256xf32>,
    %148 = vector.broadcast %108 : vector<8x1xf32> to vector<8x256xf32>
    %149 = arith.mulf %54, %148 : vector<8x256xf32>
    %150 = vector.broadcast %111 : vector<8x1xf32> to vector<8x256xf32>
    %151 = arith.addf %149, %150 : vector<8x256xf32>
    %cst_126 = arith.constant 0.000000e+00 : f32
    %152 = vector.broadcast %cst_126 : f32 to vector<8x256xf32>
    %153 = arith.maximumf %151, %152 : vector<8x256xf32>
    %c1_127 = arith.constant 1 : index
    %c0_128 = arith.constant 0 : index
    %c0_129 = arith.constant 0 : index
    %c0_130 = arith.constant 0 : index
    %c0_131 = arith.constant 0 : index
    %154 = vector.load %arg4[%c1_127, %c0_128, %c0_129, %c0_130, %c0_131] : memref<2x2x2x8x256xf32, #tpu.memory_space<vmem>>, vector<1x1x1x8x256xf32>
    %155 = vector.shape_cast %154 : vector<1x1x1x8x256xf32> to vector<8x256xf32>
    %156 = vector.shape_cast %153 : vector<8x256xf32> to vector<1x1x1x8x256xf32>
    tpu.vector_store %arg4[%c1_127, %c0_128, %c0_129, %c0_130, %c0_131], %156 {strides = array<i32>} : memref<2x2x2x8x256xf32, #tpu.memory_space<vmem>>, vector<1x1x1x8x256xf32>,
    %157 = vector.broadcast %108 : vector<8x1xf32> to vector<8x256xf32>
    %158 = arith.mulf %66, %157 : vector<8x256xf32>
    %159 = vector.broadcast %111 : vector<8x1xf32> to vector<8x256xf32>
    %160 = arith.addf %158, %159 : vector<8x256xf32>
    %cst_132 = arith.constant 0.000000e+00 : f32
    %161 = vector.broadcast %cst_132 : f32 to vector<8x256xf32>
    %162 = arith.maximumf %160, %161 : vector<8x256xf32>
    %c1_133 = arith.constant 1 : index
    %c0_134 = arith.constant 0 : index
    %c1_135 = arith.constant 1 : index
    %c0_136 = arith.constant 0 : index
    %c0_137 = arith.constant 0 : index
    %163 = vector.load %arg4[%c1_133, %c0_134, %c1_135, %c0_136, %c0_137] : memref<2x2x2x8x256xf32, #tpu.memory_space<vmem>>, vector<1x1x1x8x256xf32>
    %164 = vector.shape_cast %163 : vector<1x1x1x8x256xf32> to vector<8x256xf32>
    %165 = vector.shape_cast %162 : vector<8x256xf32> to vector<1x1x1x8x256xf32>
    tpu.vector_store %arg4[%c1_133, %c0_134, %c1_135, %c0_136, %c0_137], %165 {strides = array<i32>} : memref<2x2x2x8x256xf32, #tpu.memory_space<vmem>>, vector<1x1x1x8x256xf32>,
    %166 = vector.broadcast %108 : vector<8x1xf32> to vector<8x256xf32>
    %167 = arith.mulf %78, %166 : vector<8x256xf32>
    %168 = vector.broadcast %111 : vector<8x1xf32> to vector<8x256xf32>
    %169 = arith.addf %167, %168 : vector<8x256xf32>
    %cst_138 = arith.constant 0.000000e+00 : f32
    %170 = vector.broadcast %cst_138 : f32 to vector<8x256xf32>
    %171 = arith.maximumf %169, %170 : vector<8x256xf32>
    %c1_139 = arith.constant 1 : index
    %c1_140 = arith.constant 1 : index
    %c0_141 = arith.constant 0 : index
    %c0_142 = arith.constant 0 : index
    %c0_143 = arith.constant 0 : index
    %172 = vector.load %arg4[%c1_139, %c1_140, %c0_141, %c0_142, %c0_143] : memref<2x2x2x8x256xf32, #tpu.memory_space<vmem>>, vector<1x1x1x8x256xf32>
    %173 = vector.shape_cast %172 : vector<1x1x1x8x256xf32> to vector<8x256xf32>
    %174 = vector.shape_cast %171 : vector<8x256xf32> to vector<1x1x1x8x256xf32>
    tpu.vector_store %arg4[%c1_139, %c1_140, %c0_141, %c0_142, %c0_143], %174 {strides = array<i32>} : memref<2x2x2x8x256xf32, #tpu.memory_space<vmem>>, vector<1x1x1x8x256xf32>,
    %175 = vector.broadcast %108 : vector<8x1xf32> to vector<8x256xf32>
    %176 = arith.mulf %90, %175 : vector<8x256xf32>
    %177 = vector.broadcast %111 : vector<8x1xf32> to vector<8x256xf32>
    %178 = arith.addf %176, %177 : vector<8x256xf32>
    %cst_144 = arith.constant 0.000000e+00 : f32
    %179 = vector.broadcast %cst_144 : f32 to vector<8x256xf32>
    %180 = arith.maximumf %178, %179 : vector<8x256xf32>
    %c1_145 = arith.constant 1 : index
    %c1_146 = arith.constant 1 : index
    %c1_147 = arith.constant 1 : index
    %c0_148 = arith.constant 0 : index
    %c0_149 = arith.constant 0 : index
    %181 = vector.load %arg4[%c1_145, %c1_146, %c1_147, %c0_148, %c0_149] : memref<2x2x2x8x256xf32, #tpu.memory_space<vmem>>, vector<1x1x1x8x256xf32>
    %182 = vector.shape_cast %181 : vector<1x1x1x8x256xf32> to vector<8x256xf32>
    %183 = vector.shape_cast %180 : vector<8x256xf32> to vector<1x1x1x8x256xf32>
    tpu.vector_store %arg4[%c1_145, %c1_146, %c1_147, %c0_148, %c0_149], %183 {strides = array<i32>} : memref<2x2x2x8x256xf32, #tpu.memory_space<vmem>>, vector<1x1x1x8x256xf32>,
    return
  }
}

</mosaic_0001>

<llo_original>
// kernel: tpu_custom_call.1
$region0: #{tpu_custom_call.1}
  #allocation0 [shape = 'u32[]', space=smem, size = 0x4, offset = 0x4, fixed_abs, tag = 'smem constant byte address 0x4 - core index']
  #allocation1 [shape = 'u32[144,128]{1,0:T(1,128)}', space=vmem, size = 0x12000, scoped, tag = 'internal scratch']
  %s0 = inlined_call_operand.hbm [shape: f32[2,2,2,16,256], index: 0, kind: input, shape index: {}]
  %s1 = inlined_call_operand.hbm [shape: f32[2,2,8,16], index: 1, kind: input, shape index: {}]
  %s2 = inlined_call_operand.vmem [shape: f32[8,1], index: 2, kind: input, shape index: {}]
  %s3 = inlined_call_operand.vmem [shape: f32[8,1], index: 3, kind: input, shape index: {}]
  %s4 = inlined_call_operand.hbm [shape: f32[2,2,2,8,256], index: 4, kind: output, shape index: {}]
  %s5 = sld [smem:[#allocation0]]
  $region34: #{tpu_custom_call.1} parent=0
    _
  %s7 = ssub.s32 1, %s5
  %s8 = scalar_select 0, %s7, %s5
  $region1: #{tpu_custom_call.1} parent=0
    #allocation2 [shape = 'u8[131072]{0}', space=vmem, size = 0x20000, scoped, tag = 'input window, operand 0, single buffered']
    #allocation3 [shape = 's32[1]{0}', space=sflag, size = 0x4, scoped, tag = 'scoped memory for tpu_custom_call.1']
    #allocation4 [shape = 's32[1]{0}', space=sflag, size = 0x4, scoped, tag = 'scoped memory for tpu_custom_call.1']
    #allocation5 [shape = 'u8[16384]{0}', space=vmem, size = 0x4000, scoped, tag = 'input window, operand 1, single buffered']
    #allocation6 [shape = 's32[1]{0}', space=sflag, size = 0x4, scoped, tag = 'scoped memory for tpu_custom_call.1']
    #allocation7 [shape = 'u8[65536]{0}', space=vmem, size = 0x10000, scoped, tag = 'output window, operand 0, single buffered']
    %9 = vsyncpa [#allocation3], 0
    %10 = vsyncpa [#allocation6], 0
    %11 = vsyncpa [#allocation4], 0
    // Predicated region
    $region2: #{tpu_custom_call.1} parent=1 // pred_check
      _
    $region3: #{tpu_custom_call.1} parent=1 // pred_check_branch
      %13 = sbr.rel (0) target = $region5
    $region4: #{tpu_custom_call.1} parent=1 // pred_region
      %s15 = ssub.s32 4096, 4096
      %16 = vsyncadd [#allocation3], %s15
      %s17 = sshll.u32 [#allocation2], 4
      %s18 = int_to_ptr.vmem [resolvable:$true] %s17
      %23 = dma.hbm_to_vmem [thread:$0]  %s0, 4096, %s18, [#allocation3], 256, 256, 16
    $region5: #{tpu_custom_call.1} parent=1 // pred_fallthru
      _
    // Predicated region
    $region6: #{tpu_custom_call.1} parent=1 // pred_check
      _
    $region7: #{tpu_custom_call.1} parent=1 // pred_check_branch
      %25 = sbr.rel (0) target = $region9
    $region8: #{tpu_custom_call.1} parent=1 // pred_region
      %s27 = ssub.s32 512, 512
      %28 = vsyncadd [#allocation6], %s27
      %s29 = sshll.u32 [#allocation5], 4
      %s30 = int_to_ptr.vmem [resolvable:$true] %s29
      %35 = dma.hbm_to_vmem [thread:$0]  %s1, 512, %s30, [#allocation6], 128, 128, 8
    $region9: #{tpu_custom_call.1} parent=1 // pred_fallthru
      _
    // Predicated region
    $region10: #{tpu_custom_call.1} parent=1 // pred_check
      _
    $region11: #{tpu_custom_call.1} parent=1 // pred_check_branch
      %37 = sbr.rel (0) target = $region13
    $region12: #{tpu_custom_call.1} parent=1 // pred_region
      _
    $region13: #{tpu_custom_call.1} parent=1 // pred_fallthru
      _
    // Predicated region
    $region14: #{tpu_custom_call.1} parent=1 // pred_check
      _
    $region15: #{tpu_custom_call.1} parent=1 // pred_check_branch
      %39 = sbr.rel (0) target = $region17
    $region16: #{tpu_custom_call.1} parent=1 // pred_region
      _
    $region17: #{tpu_custom_call.1} parent=1 // pred_fallthru
      _
    // Predicated region
    $region18: #{tpu_custom_call.1} parent=1 // pred_check
      _
    $region19: #{tpu_custom_call.1} parent=1 // pred_check_branch
      %41 = sbr.rel (0) target = $region21
    $region20: #{tpu_custom_call.1} parent=1 // pred_region
      %42 = dma.done [#allocation3], 4096
    $region21: #{tpu_custom_call.1} parent=1 // pred_fallthru
      _
    // Predicated region
    $region22: #{tpu_custom_call.1} parent=1 // pred_check
      _
    $region23: #{tpu_custom_call.1} parent=1 // pred_check_branch
      %44 = sbr.rel (0) target = $region25
    $region24: #{tpu_custom_call.1} parent=1 // pred_region
      %45 = dma.done [#allocation6], 512
    $region25: #{tpu_custom_call.1} parent=1 // pred_fallthru
      _
    %v46 = vld [vmem:[#allocation5] sm:$0xff]
    %v47 = vld [vmem:[#allocation2] sm:$0xff]
    %v48 = vld [vmem:[#allocation2 + $0x8] sm:$0xff]
    %v49 = vld [vmem:[#allocation2 + $0x10] sm:$0xff]
    %v50 = vld [vmem:[#allocation2 + $0x18] sm:$0xff]
    %vm51 = vcmask 130048
    %v53 = vsel %vm51, %v46, 0
    %55 = vmatprep.subr.mxu0 %v48
    %56 = vmatpush1.msra.mxu0 %v47
    %57 = vmatprep.subr.mxu0 %v50
    %58 = vmatpush1.msra.mxu0 %v49
    %59 = vmatprep.subr.mxu0 0.0
    %60 = vmatpush1.msra.mxu0 0.0
    %61 = vmatprep.subr.mxu0 0.0
    %62 = vmatpush1.msra.mxu0 0.0
    %63 = vmatprep.subr.mxu0 0.0
    %64 = vmatpush1.msra.mxu0 0.0
    %65 = vmatprep.subr.mxu0 0.0
    %66 = vmatpush1.msra.mxu0 0.0
    %67 = vmatprep.subr.mxu0 0.0
    %68 = vmatpush1.msra.mxu0 0.0
    %69 = vmatprep.subr.mxu0 0.0
    %70 = vmatpush1.msra.mxu0 0.0
    %71 = vmatprep.subr.mxu0 0.0
    %72 = vmatpush1.msra.mxu0 0.0
    %73 = vmatprep.subr.mxu0 0.0
    %74 = vmatpush1.msra.mxu0 0.0
    %75 = vmatprep.subr.mxu0 0.0
    %76 = vmatpush1.msra.mxu0 0.0
    %77 = vmatprep.subr.mxu0 0.0
    %78 = vmatpush1.msra.mxu0 0.0
    %79 = vmatprep.subr.mxu0 0.0
    %80 = vmatpush1.msra.mxu0 0.0
    %81 = vmatprep.subr.mxu0 0.0
    %82 = vmatpush1.msra.mxu0 0.0
    %83 = vmatprep.subr.mxu0 0.0
    %84 = vmatpush1.msra.mxu0 0.0
    %85 = vmatprep.subr.mxu0 0.0
    %86 = vmatpush1.msra.mxu0 0.0
    %87 = vmatprep.subr.mxu0 0.0
    %88 = vmatpush1.msra.mxu0 0.0
    %89 = vmatprep.subr.mxu0 0.0
    %90 = vmatpush1.msra.mxu0 0.0
    %91 = vmatprep.subr.mxu0 0.0
    %92 = vmatpush1.msra.mxu0 0.0
    %93 = vmatprep.subr.mxu0 0.0
    %94 = vmatpush1.msra.mxu0 0.0
    %95 = vmatprep.subr.mxu0 0.0
    %96 = vmatpush1.msra.mxu0 0.0
    %97 = vmatprep.subr.mxu0 0.0
    %98 = vmatpush1.msra.mxu0 0.0
    %99 = vmatprep.subr.mxu0 0.0
    %100 = vmatpush1.msra.mxu0 0.0
    %101 = vmatprep.subr.mxu0 0.0
    %102 = vmatpush1.msra.mxu0 0.0
    %103 = vmatprep.subr.mxu0 0.0
    %104 = vmatpush1.msra.mxu0 0.0
    %105 = vmatprep.subr.mxu0 0.0
    %106 = vmatpush1.msra.mxu0 0.0
    %107 = vmatprep.subr.mxu0 0.0
    %108 = vmatpush1.msra.mxu0 0.0
    %109 = vmatprep.subr.mxu0 0.0
    %110 = vmatpush1.msra.mxu0 0.0
    %111 = vmatprep.subr.mxu0 0.0
    %112 = vmatpush1.msra.mxu0 0.0
    %113 = vmatprep.subr.mxu0 0.0
    %114 = vmatpush1.msra.mxu0 0.0
    %115 = vmatprep.subr.mxu0 0.0
    %116 = vmatpush1.msra.mxu0 0.0
    %117 = vmatprep.subr.mxu0 0.0
    %118 = vmatpush1.msra.mxu0 0.0
    %119 = vmatprep.mubr.f32.mxu0 0.0
    %120 = vmatmul.mubr.f32.gmra.mrb[0].mxu0 %v53
    %v121 = vpop.f32.mrb[0].mxu0
    %v122 = vadd.f32 0.0, %v121
    %v123 = vpop.f32.mrb[0].mxu0
    %v124 = vadd.f32 0.0, %v123
    %125 = vdwg.mxu0
    %v126 = vadd.f32 %v122, %v124
    %127 = vadd.xlane.f32.xlu0 %v126
    %v128 = vpop.xlane.xlu0 %127
    %v129 = vadd.f32 %v128, 0.0
    %v130 = vmul.f32 %v122, %v122
    %v131 = vmul.f32 %v124, %v124
    %v132 = vadd.f32 %v130, %v131
    %133 = vadd.xlane.f32.xlu0 %v132
    %v134 = vpop.xlane.xlu0 %133
    %v135 = vadd.f32 %v134, 0.0
    %s136 = scalar_lea.vmem [#allocation5], 8
    %v137 = vld [vmem:[%s136] sm:$0xff]
    %s138 = scalar_lea.vmem [#allocation2], 64
    %v139 = vld [vmem:[%s138] sm:$0xff]
    %v140 = vld [vmem:[%s138 + $0x8] sm:$0xff]
    %v141 = vld [vmem:[%s138 + $0x10] sm:$0xff]
    %v142 = vld [vmem:[%s138 + $0x18] sm:$0xff]
    %v144 = vsel %vm51, %v137, 0
    %146 = vmatprep.subr.mxu0 %v140
    %147 = vmatpush1.msra.mxu0 %v139
    %148 = vmatprep.subr.mxu0 %v142
    %149 = vmatpush1.msra.mxu0 %v141
    %150 = vmatprep.subr.mxu0 0.0
    %151 = vmatpush1.msra.mxu0 0.0
    %152 = vmatprep.subr.mxu0 0.0
    %153 = vmatpush1.msra.mxu0 0.0
    %154 = vmatprep.subr.mxu0 0.0
    %155 = vmatpush1.msra.mxu0 0.0
    %156 = vmatprep.subr.mxu0 0.0
    %157 = vmatpush1.msra.mxu0 0.0
    %158 = vmatprep.subr.mxu0 0.0
    %159 = vmatpush1.msra.mxu0 0.0
    %160 = vmatprep.subr.mxu0 0.0
    %161 = vmatpush1.msra.mxu0 0.0
    %162 = vmatprep.subr.mxu0 0.0
    %163 = vmatpush1.msra.mxu0 0.0
    %164 = vmatprep.subr.mxu0 0.0
    %165 = vmatpush1.msra.mxu0 0.0
    %166 = vmatprep.subr.mxu0 0.0
    %167 = vmatpush1.msra.mxu0 0.0
    %168 = vmatprep.subr.mxu0 0.0
    %169 = vmatpush1.msra.mxu0 0.0
    %170 = vmatprep.subr.mxu0 0.0
    %171 = vmatpush1.msra.mxu0 0.0
    %172 = vmatprep.subr.mxu0 0.0
    %173 = vmatpush1.msra.mxu0 0.0
    %174 = vmatprep.subr.mxu0 0.0
    %175 = vmatpush1.msra.mxu0 0.0
    %176 = vmatprep.subr.mxu0 0.0
    %177 = vmatpush1.msra.mxu0 0.0
    %178 = vmatprep.subr.mxu0 0.0
    %179 = vmatpush1.msra.mxu0 0.0
    %180 = vmatprep.subr.mxu0 0.0
    %181 = vmatpush1.msra.mxu0 0.0
    %182 = vmatprep.subr.mxu0 0.0
    %183 = vmatpush1.msra.mxu0 0.0
    %184 = vmatprep.subr.mxu0 0.0
    %185 = vmatpush1.msra.mxu0 0.0
    %186 = vmatprep.subr.mxu0 0.0
    %187 = vmatpush1.msra.mxu0 0.0
    %188 = vmatprep.subr.mxu0 0.0
    %189 = vmatpush1.msra.mxu0 0.0
    %190 = vmatprep.subr.mxu0 0.0
    %191 = vmatpush1.msra.mxu0 0.0
    %192 = vmatprep.subr.mxu0 0.0
    %193 = vmatpush1.msra.mxu0 0.0
    %194 = vmatprep.subr.mxu0 0.0
    %195 = vmatpush1.msra.mxu0 0.0
    %196 = vmatprep.subr.mxu0 0.0
    %197 = vmatpush1.msra.mxu0 0.0
    %198 = vmatprep.subr.mxu0 0.0
    %199 = vmatpush1.msra.mxu0 0.0
    %200 = vmatprep.subr.mxu0 0.0
    %201 = vmatpush1.msra.mxu0 0.0
    %202 = vmatprep.subr.mxu0 0.0
    %203 = vmatpush1.msra.mxu0 0.0
    %204 = vmatprep.subr.mxu0 0.0
    %205 = vmatpush1.msra.mxu0 0.0
    %206 = vmatprep.subr.mxu0 0.0
    %207 = vmatpush1.msra.mxu0 0.0
    %208 = vmatprep.subr.mxu0 0.0
    %209 = vmatpush1.msra.mxu0 0.0
    %210 = vmatprep.mubr.f32.mxu0 0.0
    %211 = vmatmul.mubr.f32.gmra.mrb[0].mxu0 %v144
    %v212 = vpop.f32.mrb[0].mxu0
    %v213 = vadd.f32 0.0, %v212
    %v214 = vpop.f32.mrb[0].mxu0
    %v215 = vadd.f32 0.0, %v214
    %216 = vdwg.mxu0
    %v217 = vadd.f32 %v213, %v215
    %218 = vadd.xlane.f32.xlu0 %v217
    %v219 = vpop.xlane.xlu0 %218
    %v220 = vadd.f32 %v129, %v219
    %v221 = vmul.f32 %v213, %v213
    %v222 = vmul.f32 %v215, %v215
    %v223 = vadd.f32 %v221, %v222
    %224 = vadd.xlane.f32.xlu0 %v223
    %v225 = vpop.xlane.xlu0 %224
    %v226 = vadd.f32 %v135, %v225
    %s227 = scalar_lea.vmem [#allocation5], 16
    %v228 = vld [vmem:[%s227] sm:$0xff]
    %s229 = scalar_lea.vmem [#allocation2], 128
    %v230 = vld [vmem:[%s229] sm:$0xff]
    %v231 = vld [vmem:[%s229 + $0x8] sm:$0xff]
    %v232 = vld [vmem:[%s229 + $0x10] sm:$0xff]
    %v233 = vld [vmem:[%s229 + $0x18] sm:$0xff]
    %v235 = vsel %vm51, %v228, 0
    %237 = vmatprep.subr.mxu0 %v231
    %238 = vmatpush1.msra.mxu0 %v230
    %239 = vmatprep.subr.mxu0 %v233
    %240 = vmatpush1.msra.mxu0 %v232
    %241 = vmatprep.subr.mxu0 0.0
    %242 = vmatpush1.msra.mxu0 0.0
    %243 = vmatprep.subr.mxu0 0.0
    %244 = vmatpush1.msra.mxu0 0.0
    %245 = vmatprep.subr.mxu0 0.0
    %246 = vmatpush1.msra.mxu0 0.0
    %247 = vmatprep.subr.mxu0 0.0
    %248 = vmatpush1.msra.mxu0 0.0
    %249 = vmatprep.subr.mxu0 0.0
    %250 = vmatpush1.msra.mxu0 0.0
    %251 = vmatprep.subr.mxu0 0.0
    %252 = vmatpush1.msra.mxu0 0.0
    %253 = vmatprep.subr.mxu0 0.0
    %254 = vmatpush1.msra.mxu0 0.0
    %255 = vmatprep.subr.mxu0 0.0
    %256 = vmatpush1.msra.mxu0 0.0
    %257 = vmatprep.subr.mxu0 0.0
    %258 = vmatpush1.msra.mxu0 0.0
    %259 = vmatprep.subr.mxu0 0.0
    %260 = vmatpush1.msra.mxu0 0.0
    %261 = vmatprep.subr.mxu0 0.0
    %262 = vmatpush1.msra.mxu0 0.0
    %263 = vmatprep.subr.mxu0 0.0
    %264 = vmatpush1.msra.mxu0 0.0
    %265 = vmatprep.subr.mxu0 0.0
    %266 = vmatpush1.msra.mxu0 0.0
    %267 = vmatprep.subr.mxu0 0.0
    %268 = vmatpush1.msra.mxu0 0.0
    %269 = vmatprep.subr.mxu0 0.0
    %270 = vmatpush1.msra.mxu0 0.0
    %271 = vmatprep.subr.mxu0 0.0
    %272 = vmatpush1.msra.mxu0 0.0
    %273 = vmatprep.subr.mxu0 0.0
    %274 = vmatpush1.msra.mxu0 0.0
    %275 = vmatprep.subr.mxu0 0.0
    %276 = vmatpush1.msra.mxu0 0.0
    %277 = vmatprep.subr.mxu0 0.0
    %278 = vmatpush1.msra.mxu0 0.0
    %279 = vmatprep.subr.mxu0 0.0
    %280 = vmatpush1.msra.mxu0 0.0
    %281 = vmatprep.subr.mxu0 0.0
    %282 = vmatpush1.msra.mxu0 0.0
    %283 = vmatprep.subr.mxu0 0.0
    %284 = vmatpush1.msra.mxu0 0.0
    %285 = vmatprep.subr.mxu0 0.0
    %286 = vmatpush1.msra.mxu0 0.0
    %287 = vmatprep.subr.mxu0 0.0
    %288 = vmatpush1.msra.mxu0 0.0
    %289 = vmatprep.subr.mxu0 0.0
    %290 = vmatpush1.msra.mxu0 0.0
    %291 = vmatprep.subr.mxu0 0.0
    %292 = vmatpush1.msra.mxu0 0.0
    %293 = vmatprep.subr.mxu0 0.0
    %294 = vmatpush1.msra.mxu0 0.0
    %295 = vmatprep.subr.mxu0 0.0
    %296 = vmatpush1.msra.mxu0 0.0
    %297 = vmatprep.subr.mxu0 0.0
    %298 = vmatpush1.msra.mxu0 0.0
    %299 = vmatprep.subr.mxu0 0.0
    %300 = vmatpush1.msra.mxu0 0.0
    %301 = vmatprep.mubr.f32.mxu0 0.0
    %302 = vmatmul.mubr.f32.gmra.mrb[0].mxu0 %v235
    %v303 = vpop.f32.mrb[0].mxu0
    %v304 = vadd.f32 0.0, %v303
    %v305 = vpop.f32.mrb[0].mxu0
    %v306 = vadd.f32 0.0, %v305
    %307 = vdwg.mxu0
    %v308 = vadd.f32 %v304, %v306
    %309 = vadd.xlane.f32.xlu0 %v308
    %v310 = vpop.xlane.xlu0 %309
    %v311 = vadd.f32 %v220, %v310
    %v312 = vmul.f32 %v304, %v304
    %v313 = vmul.f32 %v306, %v306
    %v314 = vadd.f32 %v312, %v313
    %315 = vadd.xlane.f32.xlu0 %v314
    %v316 = vpop.xlane.xlu0 %315
    %v317 = vadd.f32 %v226, %v316
    %s318 = scalar_lea.vmem [#allocation5], 24
    %v319 = vld [vmem:[%s318] sm:$0xff]
    %s320 = scalar_lea.vmem [#allocation2], 192
    %v321 = vld [vmem:[%s320] sm:$0xff]
    %v322 = vld [vmem:[%s320 + $0x8] sm:$0xff]
    %v323 = vld [vmem:[%s320 + $0x10] sm:$0xff]
    %v324 = vld [vmem:[%s320 + $0x18] sm:$0xff]
    %v326 = vsel %vm51, %v319, 0
    %328 = vmatprep.subr.mxu0 %v322
    %329 = vmatpush1.msra.mxu0 %v321
    %330 = vmatprep.subr.mxu0 %v324
    %331 = vmatpush1.msra.mxu0 %v323
    %332 = vmatprep.subr.mxu0 0.0
    %333 = vmatpush1.msra.mxu0 0.0
    %334 = vmatprep.subr.mxu0 0.0
    %335 = vmatpush1.msra.mxu0 0.0
    %336 = vmatprep.subr.mxu0 0.0
    %337 = vmatpush1.msra.mxu0 0.0
    %338 = vmatprep.subr.mxu0 0.0
    %339 = vmatpush1.msra.mxu0 0.0
    %340 = vmatprep.subr.mxu0 0.0
    %341 = vmatpush1.msra.mxu0 0.0
    %342 = vmatprep.subr.mxu0 0.0
    %343 = vmatpush1.msra.mxu0 0.0
    %344 = vmatprep.subr.mxu0 0.0
    %345 = vmatpush1.msra.mxu0 0.0
    %346 = vmatprep.subr.mxu0 0.0
    %347 = vmatpush1.msra.mxu0 0.0
    %348 = vmatprep.subr.mxu0 0.0
    %349 = vmatpush1.msra.mxu0 0.0
    %350 = vmatprep.subr.mxu0 0.0
    %351 = vmatpush1.msra.mxu0 0.0
    %352 = vmatprep.subr.mxu0 0.0
    %353 = vmatpush1.msra.mxu0 0.0
    %354 = vmatprep.subr.mxu0 0.0
    %355 = vmatpush1.msra.mxu0 0.0
    %356 = vmatprep.subr.mxu0 0.0
    %357 = vmatpush1.msra.mxu0 0.0
    %358 = vmatprep.subr.mxu0 0.0
    %359 = vmatpush1.msra.mxu0 0.0
    %360 = vmatprep.subr.mxu0 0.0
    %361 = vmatpush1.msra.mxu0 0.0
    %362 = vmatprep.subr.mxu0 0.0
    %363 = vmatpush1.msra.mxu0 0.0
    %364 = vmatprep.subr.mxu0 0.0
    %365 = vmatpush1.msra.mxu0 0.0
    %366 = vmatprep.subr.mxu0 0.0
    %367 = vmatpush1.msra.mxu0 0.0
    %368 = vmatprep.subr.mxu0 0.0
    %369 = vmatpush1.msra.mxu0 0.0
    %370 = vmatprep.subr.mxu0 0.0
    %371 = vmatpush1.msra.mxu0 0.0
    %372 = vmatprep.subr.mxu0 0.0
    %373 = vmatpush1.msra.mxu0 0.0
    %374 = vmatprep.subr.mxu0 0.0
    %375 = vmatpush1.msra.mxu0 0.0
    %376 = vmatprep.subr.mxu0 0.0
    %377 = vmatpush1.msra.mxu0 0.0
    %378 = vmatprep.subr.mxu0 0.0
    %379 = vmatpush1.msra.mxu0 0.0
    %380 = vmatprep.subr.mxu0 0.0
    %381 = vmatpush1.msra.mxu0 0.0
    %382 = vmatprep.subr.mxu0 0.0
    %383 = vmatpush1.msra.mxu0 0.0
    %384 = vmatprep.subr.mxu0 0.0
    %385 = vmatpush1.msra.mxu0 0.0
    %386 = vmatprep.subr.mxu0 0.0
    %387 = vmatpush1.msra.mxu0 0.0
    %388 = vmatprep.subr.mxu0 0.0
    %389 = vmatpush1.msra.mxu0 0.0
    %390 = vmatprep.subr.mxu0 0.0
    %391 = vmatpush1.msra.mxu0 0.0
    %392 = vmatprep.mubr.f32.mxu0 0.0
    %393 = vmatmul.mubr.f32.gmra.mrb[0].mxu0 %v326
    %v394 = vpop.f32.mrb[0].mxu0
    %v395 = vadd.f32 0.0, %v394
    %v396 = vpop.f32.mrb[0].mxu0
    %v397 = vadd.f32 0.0, %v396
    %398 = vdwg.mxu0
    %v399 = vadd.f32 %v395, %v397
    %400 = vadd.xlane.f32.xlu0 %v399
    %v401 = vpop.xlane.xlu0 %400
    %v402 = vadd.f32 %v311, %v401
    %v403 = vmul.f32 %v395, %v395
    %v404 = vmul.f32 %v397, %v397
    %v405 = vadd.f32 %v403, %v404
    %406 = vadd.xlane.f32.xlu0 %v405
    %v407 = vpop.xlane.xlu0 %406
    %v408 = vadd.f32 %v317, %v407
    %s409 = scalar_lea.vmem [#allocation2], 32
    %v410 = vld [vmem:[%s409] sm:$0xff]
    %v411 = vld [vmem:[%s409 + $0x8] sm:$0xff]
    %v412 = vld [vmem:[%s409 + $0x10] sm:$0xff]
    %v413 = vld [vmem:[%s409 + $0x18] sm:$0xff]
    %414 = vmatprep.subr.mxu0 %v411
    %415 = vmatpush1.msra.mxu0 %v410
    %416 = vmatprep.subr.mxu0 %v413
    %417 = vmatpush1.msra.mxu0 %v412
    %418 = vmatprep.subr.mxu0 0.0
    %419 = vmatpush1.msra.mxu0 0.0
    %420 = vmatprep.subr.mxu0 0.0
    %421 = vmatpush1.msra.mxu0 0.0
    %422 = vmatprep.subr.mxu0 0.0
    %423 = vmatpush1.msra.mxu0 0.0
    %424 = vmatprep.subr.mxu0 0.0
    %425 = vmatpush1.msra.mxu0 0.0
    %426 = vmatprep.subr.mxu0 0.0
    %427 = vmatpush1.msra.mxu0 0.0
    %428 = vmatprep.subr.mxu0 0.0
    %429 = vmatpush1.msra.mxu0 0.0
    %430 = vmatprep.subr.mxu0 0.0
    %431 = vmatpush1.msra.mxu0 0.0
    %432 = vmatprep.subr.mxu0 0.0
    %433 = vmatpush1.msra.mxu0 0.0
    %434 = vmatprep.subr.mxu0 0.0
    %435 = vmatpush1.msra.mxu0 0.0
    %436 = vmatprep.subr.mxu0 0.0
    %437 = vmatpush1.msra.mxu0 0.0
    %438 = vmatprep.subr.mxu0 0.0
    %439 = vmatpush1.msra.mxu0 0.0
    %440 = vmatprep.subr.mxu0 0.0
    %441 = vmatpush1.msra.mxu0 0.0
    %442 = vmatprep.subr.mxu0 0.0
    %443 = vmatpush1.msra.mxu0 0.0
    %444 = vmatprep.subr.mxu0 0.0
    %445 = vmatpush1.msra.mxu0 0.0
    %446 = vmatprep.subr.mxu0 0.0
    %447 = vmatpush1.msra.mxu0 0.0
    %448 = vmatprep.subr.mxu0 0.0
    %449 = vmatpush1.msra.mxu0 0.0
    %450 = vmatprep.subr.mxu0 0.0
    %451 = vmatpush1.msra.mxu0 0.0
    %452 = vmatprep.subr.mxu0 0.0
    %453 = vmatpush1.msra.mxu0 0.0
    %454 = vmatprep.subr.mxu0 0.0
    %455 = vmatpush1.msra.mxu0 0.0
    %456 = vmatprep.subr.mxu0 0.0
    %457 = vmatpush1.msra.mxu0 0.0
    %458 = vmatprep.subr.mxu0 0.0
    %459 = vmatpush1.msra.mxu0 0.0
    %460 = vmatprep.subr.mxu0 0.0
    %461 = vmatpush1.msra.mxu0 0.0
    %462 = vmatprep.subr.mxu0 0.0
    %463 = vmatpush1.msra.mxu0 0.0
    %464 = vmatprep.subr.mxu0 0.0
    %465 = vmatpush1.msra.mxu0 0.0
    %466 = vmatprep.subr.mxu0 0.0
    %467 = vmatpush1.msra.mxu0 0.0
    %468 = vmatprep.subr.mxu0 0.0
    %469 = vmatpush1.msra.mxu0 0.0
    %470 = vmatprep.subr.mxu0 0.0
    %471 = vmatpush1.msra.mxu0 0.0
    %472 = vmatprep.subr.mxu0 0.0
    %473 = vmatpush1.msra.mxu0 0.0
    %474 = vmatprep.subr.mxu0 0.0
    %475 = vmatpush1.msra.mxu0 0.0
    %476 = vmatprep.subr.mxu0 0.0
    %477 = vmatpush1.msra.mxu0 0.0
    %478 = vmatprep.mubr.f32.mxu0 0.0
    %479 = vmatmul.mubr.f32.gmra.mrb[0].mxu0 %v53
    %v480 = vpop.f32.mrb[0].mxu0
    %v481 = vadd.f32 0.0, %v480
    %v482 = vpop.f32.mrb[0].mxu0
    %v483 = vadd.f32 0.0, %v482
    %484 = vdwg.mxu0
    %v485 = vadd.f32 %v481, %v483
    %486 = vadd.xlane.f32.xlu0 %v485
    %v487 = vpop.xlane.xlu0 %486
    %v488 = vadd.f32 %v402, %v487
    %v489 = vmul.f32 %v481, %v481
    %v490 = vmul.f32 %v483, %v483
    %v491 = vadd.f32 %v489, %v490
    %492 = vadd.xlane.f32.xlu0 %v491
    %v493 = vpop.xlane.xlu0 %492
    %v494 = vadd.f32 %v408, %v493
    %s495 = scalar_lea.vmem [#allocation2], 96
    %v496 = vld [vmem:[%s495] sm:$0xff]
    %v497 = vld [vmem:[%s495 + $0x8] sm:$0xff]
    %v498 = vld [vmem:[%s495 + $0x10] sm:$0xff]
    %v499 = vld [vmem:[%s495 + $0x18] sm:$0xff]
    %500 = vmatprep.subr.mxu0 %v497
    %501 = vmatpush1.msra.mxu0 %v496
    %502 = vmatprep.subr.mxu0 %v499
    %503 = vmatpush1.msra.mxu0 %v498
    %504 = vmatprep.subr.mxu0 0.0
    %505 = vmatpush1.msra.mxu0 0.0
    %506 = vmatprep.subr.mxu0 0.0
    %507 = vmatpush1.msra.mxu0 0.0
    %508 = vmatprep.subr.mxu0 0.0
    %509 = vmatpush1.msra.mxu0 0.0
    %510 = vmatprep.subr.mxu0 0.0
    %511 = vmatpush1.msra.mxu0 0.0
    %512 = vmatprep.subr.mxu0 0.0
    %513 = vmatpush1.msra.mxu0 0.0
    %514 = vmatprep.subr.mxu0 0.0
    %515 = vmatpush1.msra.mxu0 0.0
    %516 = vmatprep.subr.mxu0 0.0
    %517 = vmatpush1.msra.mxu0 0.0
    %518 = vmatprep.subr.mxu0 0.0
    %519 = vmatpush1.msra.mxu0 0.0
    %520 = vmatprep.subr.mxu0 0.0
    %521 = vmatpush1.msra.mxu0 0.0
    %522 = vmatprep.subr.mxu0 0.0
    %523 = vmatpush1.msra.mxu0 0.0
    %524 = vmatprep.subr.mxu0 0.0
    %525 = vmatpush1.msra.mxu0 0.0
    %526 = vmatprep.subr.mxu0 0.0
    %527 = vmatpush1.msra.mxu0 0.0
    %528 = vmatprep.subr.mxu0 0.0
    %529 = vmatpush1.msra.mxu0 0.0
    %530 = vmatprep.subr.mxu0 0.0
    %531 = vmatpush1.msra.mxu0 0.0
    %532 = vmatprep.subr.mxu0 0.0
    %533 = vmatpush1.msra.mxu0 0.0
    %534 = vmatprep.subr.mxu0 0.0
    %535 = vmatpush1.msra.mxu0 0.0
    %536 = vmatprep.subr.mxu0 0.0
    %537 = vmatpush1.msra.mxu0 0.0
    %538 = vmatprep.subr.mxu0 0.0
    %539 = vmatpush1.msra.mxu0 0.0
    %540 = vmatprep.subr.mxu0 0.0
    %541 = vmatpush1.msra.mxu0 0.0
    %542 = vmatprep.subr.mxu0 0.0
    %543 = vmatpush1.msra.mxu0 0.0
    %544 = vmatprep.subr.mxu0 0.0
    %545 = vmatpush1.msra.mxu0 0.0
    %546 = vmatprep.subr.mxu0 0.0
    %547 = vmatpush1.msra.mxu0 0.0
    %548 = vmatprep.subr.mxu0 0.0
    %549 = vmatpush1.msra.mxu0 0.0
    %550 = vmatprep.subr.mxu0 0.0
    %551 = vmatpush1.msra.mxu0 0.0
    %552 = vmatprep.subr.mxu0 0.0
    %553 = vmatpush1.msra.mxu0 0.0
    %554 = vmatprep.subr.mxu0 0.0
    %555 = vmatpush1.msra.mxu0 0.0
    %556 = vmatprep.subr.mxu0 0.0
    %557 = vmatpush1.msra.mxu0 0.0
    %558 = vmatprep.subr.mxu0 0.0
    %559 = vmatpush1.msra.mxu0 0.0
    %560 = vmatprep.subr.mxu0 0.0
    %561 = vmatpush1.msra.mxu0 0.0
    %562 = vmatprep.subr.mxu0 0.0
    %563 = vmatpush1.msra.mxu0 0.0
    %564 = vmatprep.mubr.f32.mxu0 0.0
    %565 = vmatmul.mubr.f32.gmra.mrb[0].mxu0 %v144
    %v566 = vpop.f32.mrb[0].mxu0
    %v567 = vadd.f32 0.0, %v566
    %v568 = vpop.f32.mrb[0].mxu0
    %v569 = vadd.f32 0.0, %v568
    %570 = vdwg.mxu0
    %v571 = vadd.f32 %v567, %v569
    %572 = vadd.xlane.f32.xlu0 %v571
    %v573 = vpop.xlane.xlu0 %572
    %v574 = vadd.f32 %v488, %v573
    %v575 = vmul.f32 %v567, %v567
    %v576 = vmul.f32 %v569, %v569
    %v577 = vadd.f32 %v575, %v576
    %578 = vadd.xlane.f32.xlu0 %v577
    %v579 = vpop.xlane.xlu0 %578
    %v580 = vadd.f32 %v494, %v579
    %s581 = scalar_lea.vmem [#allocation2], 160
    %v582 = vld [vmem:[%s581] sm:$0xff]
    %v583 = vld [vmem:[%s581 + $0x8] sm:$0xff]
    %v584 = vld [vmem:[%s581 + $0x10] sm:$0xff]
    %v585 = vld [vmem:[%s581 + $0x18] sm:$0xff]
    %586 = vmatprep.subr.mxu0 %v583
    %587 = vmatpush1.msra.mxu0 %v582
    %588 = vmatprep.subr.mxu0 %v585
    %589 = vmatpush1.msra.mxu0 %v584
    %590 = vmatprep.subr.mxu0 0.0
    %591 = vmatpush1.msra.mxu0 0.0
    %592 = vmatprep.subr.mxu0 0.0
    %593 = vmatpush1.msra.mxu0 0.0
    %594 = vmatprep.subr.mxu0 0.0
    %595 = vmatpush1.msra.mxu0 0.0
    %596 = vmatprep.subr.mxu0 0.0
    %597 = vmatpush1.msra.mxu0 0.0
    %598 = vmatprep.subr.mxu0 0.0
    %599 = vmatpush1.msra.mxu0 0.0
    %600 = vmatprep.subr.mxu0 0.0
    %601 = vmatpush1.msra.mxu0 0.0
    %602 = vmatprep.subr.mxu0 0.0
    %603 = vmatpush1.msra.mxu0 0.0
    %604 = vmatprep.subr.mxu0 0.0
    %605 = vmatpush1.msra.mxu0 0.0
    %606 = vmatprep.subr.mxu0 0.0
    %607 = vmatpush1.msra.mxu0 0.0
    %608 = vmatprep.subr.mxu0 0.0
    %609 = vmatpush1.msra.mxu0 0.0
    %610 = vmatprep.subr.mxu0 0.0
    %611 = vmatpush1.msra.mxu0 0.0
    %612 = vmatprep.subr.mxu0 0.0
    %613 = vmatpush1.msra.mxu0 0.0
    %614 = vmatprep.subr.mxu0 0.0
    %615 = vmatpush1.msra.mxu0 0.0
    %616 = vmatprep.subr.mxu0 0.0
    %617 = vmatpush1.msra.mxu0 0.0
    %618 = vmatprep.subr.mxu0 0.0
    %619 = vmatpush1.msra.mxu0 0.0
    %620 = vmatprep.subr.mxu0 0.0
    %621 = vmatpush1.msra.mxu0 0.0
    %622 = vmatprep.subr.mxu0 0.0
    %623 = vmatpush1.msra.mxu0 0.0
    %624 = vmatprep.subr.mxu0 0.0
    %625 = vmatpush1.msra.mxu0 0.0
    %626 = vmatprep.subr.mxu0 0.0
    %627 = vmatpush1.msra.mxu0 0.0
    %628 = vmatprep.subr.mxu0 0.0
    %629 = vmatpush1.msra.mxu0 0.0
    %630 = vmatprep.subr.mxu0 0.0
    %631 = vmatpush1.msra.mxu0 0.0
    %632 = vmatprep.subr.mxu0 0.0
    %633 = vmatpush1.msra.mxu0 0.0
    %634 = vmatprep.subr.mxu0 0.0
    %635 = vmatpush1.msra.mxu0 0.0
    %636 = vmatprep.subr.mxu0 0.0
    %637 = vmatpush1.msra.mxu0 0.0
    %638 = vmatprep.subr.mxu0 0.0
    %639 = vmatpush1.msra.mxu0 0.0
    %640 = vmatprep.subr.mxu0 0.0
    %641 = vmatpush1.msra.mxu0 0.0
    %642 = vmatprep.subr.mxu0 0.0
    %643 = vmatpush1.msra.mxu0 0.0
    %644 = vmatprep.subr.mxu0 0.0
    %645 = vmatpush1.msra.mxu0 0.0
    %646 = vmatprep.subr.mxu0 0.0
    %647 = vmatpush1.msra.mxu0 0.0
    %648 = vmatprep.subr.mxu0 0.0
    %649 = vmatpush1.msra.mxu0 0.0
    %650 = vmatprep.mubr.f32.mxu0 0.0
    %651 = vmatmul.mubr.f32.gmra.mrb[0].mxu0 %v235
    %v652 = vpop.f32.mrb[0].mxu0
    %v653 = vadd.f32 0.0, %v652
    %v654 = vpop.f32.mrb[0].mxu0
    %v655 = vadd.f32 0.0, %v654
    %656 = vdwg.mxu0
    %v657 = vadd.f32 %v653, %v655
    %658 = vadd.xlane.f32.xlu0 %v657
    %v659 = vpop.xlane.xlu0 %658
    %v660 = vadd.f32 %v574, %v659
    %v661 = vmul.f32 %v653, %v653
    %v662 = vmul.f32 %v655, %v655
    %v663 = vadd.f32 %v661, %v662
    %664 = vadd.xlane.f32.xlu0 %v663
    %v665 = vpop.xlane.xlu0 %664
    %v666 = vadd.f32 %v580, %v665
    %s667 = scalar_lea.vmem [#allocation2], 224
    %v668 = vld [vmem:[%s667] sm:$0xff]
    %v669 = vld [vmem:[%s667 + $0x8] sm:$0xff]
    %v670 = vld [vmem:[%s667 + $0x10] sm:$0xff]
    %v671 = vld [vmem:[%s667 + $0x18] sm:$0xff]
    %672 = vmatprep.subr.mxu0 %v669
    %673 = vmatpush1.msra.mxu0 %v668
    %674 = vmatprep.subr.mxu0 %v671
    %675 = vmatpush1.msra.mxu0 %v670
    %676 = vmatprep.subr.mxu0 0.0
    %677 = vmatpush1.msra.mxu0 0.0
    %678 = vmatprep.subr.mxu0 0.0
    %679 = vmatpush1.msra.mxu0 0.0
    %680 = vmatprep.subr.mxu0 0.0
    %681 = vmatpush1.msra.mxu0 0.0
    %682 = vmatprep.subr.mxu0 0.0
    %683 = vmatpush1.msra.mxu0 0.0
    %684 = vmatprep.subr.mxu0 0.0
    %685 = vmatpush1.msra.mxu0 0.0
    %686 = vmatprep.subr.mxu0 0.0
    %687 = vmatpush1.msra.mxu0 0.0
    %688 = vmatprep.subr.mxu0 0.0
    %689 = vmatpush1.msra.mxu0 0.0
    %690 = vmatprep.subr.mxu0 0.0
    %691 = vmatpush1.msra.mxu0 0.0
    %692 = vmatprep.subr.mxu0 0.0
    %693 = vmatpush1.msra.mxu0 0.0
    %694 = vmatprep.subr.mxu0 0.0
    %695 = vmatpush1.msra.mxu0 0.0
    %696 = vmatprep.subr.mxu0 0.0
    %697 = vmatpush1.msra.mxu0 0.0
    %698 = vmatprep.subr.mxu0 0.0
    %699 = vmatpush1.msra.mxu0 0.0
    %700 = vmatprep.subr.mxu0 0.0
    %701 = vmatpush1.msra.mxu0 0.0
    %702 = vmatprep.subr.mxu0 0.0
    %703 = vmatpush1.msra.mxu0 0.0
    %704 = vmatprep.subr.mxu0 0.0
    %705 = vmatpush1.msra.mxu0 0.0
    %706 = vmatprep.subr.mxu0 0.0
    %707 = vmatpush1.msra.mxu0 0.0
    %708 = vmatprep.subr.mxu0 0.0
    %709 = vmatpush1.msra.mxu0 0.0
    %710 = vmatprep.subr.mxu0 0.0
    %711 = vmatpush1.msra.mxu0 0.0
    %712 = vmatprep.subr.mxu0 0.0
    %713 = vmatpush1.msra.mxu0 0.0
    %714 = vmatprep.subr.mxu0 0.0
    %715 = vmatpush1.msra.mxu0 0.0
    %716 = vmatprep.subr.mxu0 0.0
    %717 = vmatpush1.msra.mxu0 0.0
    %718 = vmatprep.subr.mxu0 0.0
    %719 = vmatpush1.msra.mxu0 0.0
    %720 = vmatprep.subr.mxu0 0.0
    %721 = vmatpush1.msra.mxu0 0.0
    %722 = vmatprep.subr.mxu0 0.0
    %723 = vmatpush1.msra.mxu0 0.0
    %724 = vmatprep.subr.mxu0 0.0
    %725 = vmatpush1.msra.mxu0 0.0
    %726 = vmatprep.subr.mxu0 0.0
    %727 = vmatpush1.msra.mxu0 0.0
    %728 = vmatprep.subr.mxu0 0.0
    %729 = vmatpush1.msra.mxu0 0.0
    %730 = vmatprep.subr.mxu0 0.0
    %731 = vmatpush1.msra.mxu0 0.0
    %732 = vmatprep.subr.mxu0 0.0
    %733 = vmatpush1.msra.mxu0 0.0
    %734 = vmatprep.subr.mxu0 0.0
    %735 = vmatpush1.msra.mxu0 0.0
    %736 = vmatprep.mubr.f32.mxu0 0.0
    %737 = vmatmul.mubr.f32.gmra.mrb[0].mxu0 %v326
    %v738 = vpop.f32.mrb[0].mxu0
    %v739 = vadd.f32 0.0, %v738
    %v740 = vpop.f32.mrb[0].mxu0
    %v741 = vadd.f32 0.0, %v740
    %742 = vdwg.mxu0
    %v743 = vadd.f32 %v739, %v741
    %744 = vadd.xlane.f32.xlu0 %v743
    %v745 = vpop.xlane.xlu0 %744
    %v746 = vadd.f32 %v660, %v745
    %v747 = vmul.f32 %v739, %v739
    %v748 = vmul.f32 %v741, %v741
    %v749 = vadd.f32 %v747, %v748
    %750 = vadd.xlane.f32.xlu0 %v749
    %v751 = vpop.xlane.xlu0 %750
    %v752 = vadd.f32 %v666, %v751
    %v753 = vmul.f32 %v746, 0.00048828125
    %v754 = vmul.f32 %v752, 0.00048828125
    %v755 = vmul.f32 %v753, %v753
    %v756 = vsub.f32 %v754, %v755
    %v757 = vld [vmem:[%s2] sm:$0xff]
    %v758 = vadd.f32 %v756, 1e-05
    %v759 = vrsqrt.pop %v758
    %v760 = vmul.f32 %v757, %v759
    %v761 = vld [vmem:[%s3] sm:$0xff]
    %v762 = vmul.f32 %v753, %v760
    %v763 = vsub.f32 %v761, %v762
    %765 = vset.pattern.permute.xlu0 0
    %766 = vperm.xlu0 %765, %v760
    %v767 = vpop.permute.xlu0 %766
    %v769 = vmul.f32 %v122, %v767
    %v770 = vmul.f32 %v124, %v767
    %772 = vset.pattern.permute.xlu0 0
    %773 = vperm.xlu0 %772, %v763
    %v774 = vpop.permute.xlu0 %773
    %v776 = vadd.f32 %v769, %v774
    %v777 = vadd.f32 %v770, %v774
    %v778 = vmax.f32 %v776, 0.0
    %v779 = vmax.f32 %v777, 0.0
    %780 = vst [vmem:[#allocation7] sm:$0xff] %v778
    %781 = vst [vmem:[#allocation7 + $0x8] sm:$0xff] %v779
    %v782 = vmul.f32 %v213, %v767
    %v783 = vmul.f32 %v215, %v767
    %v784 = vadd.f32 %v782, %v774
    %v785 = vadd.f32 %v783, %v774
    %v786 = vmax.f32 %v784, 0.0
    %v787 = vmax.f32 %v785, 0.0
    %s788 = scalar_lea.vmem [#allocation7], 16
    %789 = vst [vmem:[%s788] sm:$0xff] %v786
    %790 = vst [vmem:[%s788 + $0x8] sm:$0xff] %v787
    %v791 = vmul.f32 %v304, %v767
    %v792 = vmul.f32 %v306, %v767
    %v793 = vadd.f32 %v791, %v774
    %v794 = vadd.f32 %v792, %v774
    %v795 = vmax.f32 %v793, 0.0
    %v796 = vmax.f32 %v794, 0.0
    %s797 = scalar_lea.vmem [#allocation7], 32
    %798 = vst [vmem:[%s797] sm:$0xff] %v795
    %799 = vst [vmem:[%s797 + $0x8] sm:$0xff] %v796
    %v800 = vmul.f32 %v395, %v767
    %v801 = vmul.f32 %v397, %v767
    %v802 = vadd.f32 %v800, %v774
    %v803 = vadd.f32 %v801, %v774
    %v804 = vmax.f32 %v802, 0.0
    %v805 = vmax.f32 %v803, 0.0
    %s806 = scalar_lea.vmem [#allocation7], 48
    %807 = vst [vmem:[%s806] sm:$0xff] %v804
    %808 = vst [vmem:[%s806 + $0x8] sm:$0xff] %v805
    %v809 = vmul.f32 %v481, %v767
    %v810 = vmul.f32 %v483, %v767
    %v811 = vadd.f32 %v809, %v774
    %v812 = vadd.f32 %v810, %v774
    %v813 = vmax.f32 %v811, 0.0
    %v814 = vmax.f32 %v812, 0.0
    %s815 = scalar_lea.vmem [#allocation7], 64
    %816 = vst [vmem:[%s815] sm:$0xff] %v813
    %817 = vst [vmem:[%s815 + $0x8] sm:$0xff] %v814
    %v818 = vmul.f32 %v567, %v767
    %v819 = vmul.f32 %v569, %v767
    %v820 = vadd.f32 %v818, %v774
    %v821 = vadd.f32 %v819, %v774
    %v822 = vmax.f32 %v820, 0.0
    %v823 = vmax.f32 %v821, 0.0
    %s824 = scalar_lea.vmem [#allocation7], 80
    %825 = vst [vmem:[%s824] sm:$0xff] %v822
    %826 = vst [vmem:[%s824 + $0x8] sm:$0xff] %v823
    %v827 = vmul.f32 %v653, %v767
    %v828 = vmul.f32 %v655, %v767
    %v829 = vadd.f32 %v827, %v774
    %v830 = vadd.f32 %v828, %v774
    %v831 = vmax.f32 %v829, 0.0
    %v832 = vmax.f32 %v830, 0.0
    %s833 = scalar_lea.vmem [#allocation7], 96
    %834 = vst [vmem:[%s833] sm:$0xff] %v831
    %835 = vst [vmem:[%s833 + $0x8] sm:$0xff] %v832
    %v836 = vmul.f32 %v739, %v767
    %v837 = vmul.f32 %v741, %v767
    %v838 = vadd.f32 %v836, %v774
    %v839 = vadd.f32 %v837, %v774
    %v840 = vmax.f32 %v838, 0.0
    %v841 = vmax.f32 %v839, 0.0
    %s842 = scalar_lea.vmem [#allocation7], 112
    %843 = vst [vmem:[%s842] sm:$0xff] %v840
    %844 = vst [vmem:[%s842 + $0x8] sm:$0xff] %v841
    // Predicated region
    $region26: #{tpu_custom_call.1} parent=1 // pred_check
      _
    $region27: #{tpu_custom_call.1} parent=1 // pred_check_branch
      %846 = sbr.rel (0) target = $region29
    $region28: #{tpu_custom_call.1} parent=1 // pred_region
      %s848 = ssub.s32 2048, 2048
      %849 = vsyncadd [#allocation4], %s848
      %s850 = sshll.u32 [#allocation7], 4
      %s851 = int_to_ptr.vmem [resolvable:$true] %s850
      %856 = dma.vmem_to_hbm [thread:$0]  %s851, 2048, %s4, [#allocation4], 256, 256, 16
    $region29: #{tpu_custom_call.1} parent=1 // pred_fallthru
      _
    // Predicated region
    $region30: #{tpu_custom_call.1} parent=1 // pred_check
      _
    $region31: #{tpu_custom_call.1} parent=1 // pred_check_branch
      %858 = sbr.rel (0) target = $region33
    $region32: #{tpu_custom_call.1} parent=1 // pred_region
      %859 = dma.done [#allocation4], 2048
    $region33: #{tpu_custom_call.1} parent=1 // pred_fallthru
      _
    %860 = vsyncpa [#allocation3], 1
    %861 = vsyncpa [#allocation6], 1
    %862 = vsyncpa [#allocation4], 1

</llo_original>
